<compile_context>
chip_gen: v5e
topology: v5e:2x2
jax: 0.10.0
libtpu: 0.0.40
codegen_flags: <defaults>
</compile_context>

<pallas_src>
import functools

import jax
import jax.numpy as jnp
from jax import lax
from jax.experimental import pallas as pl
from jax.experimental.pallas import tpu as pltpu


def _round_up(x, m):
    return (x + m - 1) // m * m


def _largest_divisor_leq(n, cap):
    cap = max(1, min(n, cap))
    for d in range(cap, 0, -1):
        if n % d == 0:
            return d
    return 1


@functools.lru_cache(maxsize=1)
def _vmem_capacity_bytes():
    try:
        return int(pltpu.get_tpu_info().vmem_capacity_bytes)
    except Exception:
        return 64 * 1024 * 1024  # conservative fallback (v7x per-TC VMEM)


def _choose_tiles(BH, M, N, K, in_bytes, out_bytes, budget, max_tile_k):
    """Pick (hblk, tm, tn, tk, Mp, Np, Kp).

    Full-dim blocks for small dims (no HBM padding -- Mosaic pads to vreg
    tiles in VMEM for free); large dims are tiled lane/sublane aligned.  tk
    prefers the whole K so the common case is a single k-step with no
    accumulator traffic at all.
    """
    tm = M if M <= 256 else 256            # multiple of 8 when tiled
    tn = N if N <= 512 else 512            # multiple of 128 when tiled

    def per_head_bytes(tk, with_acc):
        v = 2 * (tm * tk + tk * tn) * in_bytes      # double-buffered inputs
        v += 2 * tm * tn * out_bytes                # double-buffered output
        if with_acc:
            v += tm * tn * 4                        # f32 accumulator scratch
        return v

    k_cap = K if max_tile_k is None else max(1, min(K, int(max_tile_k)))
    if k_cap == K and per_head_bytes(K, False) <= budget:
        tk = K                                      # single k-step, no padding
    else:
        avail = budget - 2 * tm * tn * out_bytes - tm * tn * 4
        tk_fit = max(128, avail // (2 * (tm + tn) * in_bytes))
        tk = max(128, (min(k_cap, tk_fit) // 128) * 128)

    Mp, Np = _round_up(M, tm), _round_up(N, tn)
    Kp = K if tk == K else _round_up(K, tk)
    multi_k = Kp > tk

    hblk_cap = max(1, budget // max(per_head_bytes(tk, multi_k), 1))
    hblk_cap = min(hblk_cap, 256)          # keep per-step blocks sane
    # Keep at least two parallel grid steps so megacore / v7x's two
    # TensorCores have something to shard across.
    if BH >= 2 and (Mp // tm) * (Np // tn) < 2:
        hblk_cap = min(hblk_cap, BH // 2)
    hblk = _largest_divisor_leq(BH, hblk_cap)
    return hblk, tm, tn, tk, Mp, Np, Kp


def _make_kernel(multi_k, use_scratch, compute_dtype, precision):
    def tile_matmul(a_ref, b_ref):
        a, b = a_ref[...], b_ref[...]
        if compute_dtype is not None and a.dtype != jnp.dtype(compute_dtype):
            a = a.astype(compute_dtype)     # in-kernel cast: VPU slot, ~free
            b = b.astype(compute_dtype)
        return jnp.einsum(
            "hmk,hkn->hmn", a, b,
            preferred_element_type=jnp.float32, precision=precision)

    if not multi_k:
        # Whole contraction in one tile: write the output block directly.
        def kernel(a_ref, b_ref, o_ref):
            o_ref[...] = tile_matmul(a_ref, b_ref).astype(o_ref.dtype)
        return kernel

    if not use_scratch:
        # f32 output: accumulate straight into the resident output block.
        def kernel(a_ref, b_ref, o_ref):
            k = pl.program_id(3)
            p = tile_matmul(a_ref, b_ref)

            @pl.when(k == 0)
            def _assign():
                o_ref[...] = p

            @pl.when(k > 0)
            def _accum():
                o_ref[...] += p
        return kernel

    # Non-f32 output: f32 scratch accumulator, assign on k==0 (no zero fill).
    def kernel(a_ref, b_ref, o_ref, acc_ref):
        k = pl.program_id(3)
        p = tile_matmul(a_ref, b_ref)

        @pl.when(k == 0)
        def _assign():
            acc_ref[...] = p

        @pl.when(k > 0)
        def _accum():
            acc_ref[...] += p

        @pl.when(k == pl.num_programs(3) - 1)
        def _finalize():
            o_ref[...] = acc_ref[...].astype(o_ref.dtype)
    return kernel


@functools.partial(jax.jit, static_argnames=("compute_dtype", "max_tile_k"))
def quant_matmul(A, B, compute_dtype=None, max_tile_k=None):
    """Pallas TPU implementation of QuantMatMul.forward(A, B) (quant disabled).

    compute_dtype=None keeps the input dtype (f32 inputs use HIGHEST matmul
    precision => exact module semantics); pass jnp.bfloat16 for an opt-in
    fast path (cast happens inside the kernel, not as an HBM pre-pass).
    """
    # TODO(synk): UniformQuantizer / LogSqrt2Quantizer (use_input_quant=True
    # branch) are not defined in the provided source and are inactive in the
    # default forward, so the quantization branch is not implemented.
    assert A.ndim >= 2 and A.ndim == B.ndim
    *lead_a, M, K = A.shape
    *lead_b, K2, N = B.shape
    assert K == K2 and tuple(lead_a) == tuple(lead_b), "shape mismatch for A @ B"

    out_dtype = jnp.result_type(A.dtype, B.dtype)
    cdt = jnp.dtype(out_dtype if compute_dtype is None else compute_dtype)
    precision = (lax.Precision.HIGHEST if cdt == jnp.dtype(jnp.float32)
                 else lax.Precision.DEFAULT)

    BH = 1
    for d in lead_a:
        BH *= int(d)
    A3 = A.reshape(BH, M, K)
    B3 = B.reshape(BH, K, N)

    in_bytes = max(A.dtype.itemsize, B.dtype.itemsize)
    out_bytes = jnp.dtype(out_dtype).itemsize

    vmem_cap = _vmem_capacity_bytes()
    budget = int(vmem_cap * 0.65)          # ~41 MiB on v7x, ~83 MiB on v5e/v6e
    vmem_limit = int(vmem_cap * 0.78)      # ~50 MiB on v7x, ~100 MiB on v5e/v6e

    hblk, tm, tn, tk, Mp, Np, Kp = _choose_tiles(
        BH, M, N, K, in_bytes, out_bytes, budget, max_tile_k)

    # Pad only dims that are actually tiled and don't divide evenly.  K-padding
    # with zeros is exact for the contraction; M/N padding is sliced off after.
    if (Mp, Kp) != (M, K):
        A3 = jnp.pad(A3, ((0, 0), (0, Mp - M), (0, Kp - K)))
    if (Kp, Np) != (K, N):
        B3 = jnp.pad(B3, ((0, 0), (0, Kp - K), (0, Np - N)))

    grid = (BH // hblk, Mp // tm, Np // tn, Kp // tk)
    multi_k = grid[3] > 1
    use_scratch = multi_k and out_dtype != jnp.dtype(jnp.float32)

    kernel = _make_kernel(
        multi_k, use_scratch,
        None if compute_dtype is None else cdt, precision)

    scratch_shapes = (
        [pltpu.VMEM((hblk, tm, tn), jnp.float32)] if use_scratch else [])

    flops = 2 * BH * M * N * K
    bytes_accessed = (A.size * A.dtype.itemsize + B.size * B.dtype.itemsize
                      + BH * M * N * out_bytes)

    out = pl.pallas_call(
        kernel,
        out_shape=jax.ShapeDtypeStruct((BH, Mp, Np), out_dtype),
        grid_spec=pltpu.PrefetchScalarGridSpec(
            num_scalar_prefetch=0,
            grid=grid,
            in_specs=[
                pl.BlockSpec((hblk, tm, tk), lambda h, i, j, k: (h, i, k)),
                pl.BlockSpec((hblk, tk, tn), lambda h, i, j, k: (h, k, j)),
            ],
            out_specs=pl.BlockSpec((hblk, tm, tn), lambda h, i, j, k: (h, i, j)),
            scratch_shapes=scratch_shapes,
        ),
        compiler_params=pltpu.CompilerParams(
            dimension_semantics=("parallel", "parallel", "parallel", "arbitrary"),
            vmem_limit_bytes=vmem_limit,
        ),
        cost_estimate=pl.CostEstimate(
            flops=flops, transcendentals=0, bytes_accessed=bytes_accessed),
    )(A3, B3)

    if (Mp, Np) != (M, N):
        out = out[:, :M, :N]
    return out.reshape(*lead_a, M, N)


if __name__ == "__main__":
    key = jax.random.PRNGKey(0)
    kA, kB, kC, kD = jax.random.split(key, 4)

    # Attention-style shapes: (batch=2, heads=4, seq=8, hidden=32).
    batch, heads, seq, hidden = 2, 4, 8, 32
    A = jax.random.normal(kA, (batch, heads, seq, hidden), dtype=jnp.float32)
    B = jax.random.normal(kB, (batch, heads, hidden, seq), dtype=jnp.float32)

    out = jax.block_until_ready(quant_matmul(A, B))
    ref = jnp.matmul(A, B, precision=lax.Precision.HIGHEST)
    assert out.shape == ref.shape, (out.shape, ref.shape)
    assert out.dtype == ref.dtype, (out.dtype, ref.dtype)
    assert jnp.allclose(out, ref, atol=1e-4, rtol=1e-4), float(
        jnp.max(jnp.abs(out - ref)))

    # Exercise the multi-k-step (in-place accumulating) path with a forced
    # small contraction tile.
    K2 = 256
    A2 = jax.random.normal(kC, (batch, heads, seq, K2), dtype=jnp.float32)
    B2 = jax.random.normal(kD, (batch, heads, K2, seq), dtype=jnp.float32)
    out2 = jax.block_until_ready(quant_matmul(A2, B2, max_tile_k=128))
    ref2 = jnp.matmul(A2, B2, precision=lax.Precision.HIGHEST)
    assert out2.shape == ref2.shape and out2.dtype == ref2.dtype
    assert jnp.allclose(out2, ref2, atol=1e-3, rtol=1e-4), float(
        jnp.max(jnp.abs(out2 - ref2)))

    print("KERNEL_OK")
</pallas_src>

<mosaic_0001>
module attributes {stable_mosaic.version = 11 : i64} {
  func.func @kernel(%arg0: i32, %arg1: i32, %arg2: i32, %arg3: i32, %arg4: memref<4x8x32xf32, #tpu.memory_space<vmem>>, %arg5: memref<4x32x8xf32, #tpu.memory_space<vmem>>, %arg6: memref<4x8x8xf32, #tpu.memory_space<vmem>>) attributes {dimension_semantics = [#tpu.dimension_semantics<parallel>, #tpu.dimension_semantics<parallel>, #tpu.dimension_semantics<parallel>, #tpu.dimension_semantics<arbitrary>], iteration_bounds = array<i64: 2, 1, 1, 1>, scalar_prefetch = 0 : i64, scratch_operands = 0 : i64, tpu.core_type = #tpu.core_type<tc>, window_params = [{transform_indices = @transform_0, window_bounds = array<i64: 4, 8, 32>}, {transform_indices = @transform_1, window_bounds = array<i64: 4, 32, 8>}, {transform_indices = @transform_2, window_bounds = array<i64: 4, 8, 8>}]} {
    %c0 = arith.constant 0 : index
    %c0_0 = arith.constant 0 : index
    %c0_1 = arith.constant 0 : index
    %0 = vector.load %arg4[%c0, %c0_0, %c0_1] : memref<4x8x32xf32, #tpu.memory_space<vmem>>, vector<4x8x32xf32>
    %c0_2 = arith.constant 0 : index
    %c0_3 = arith.constant 0 : index
    %c0_4 = arith.constant 0 : index
    %1 = vector.load %arg5[%c0_2, %c0_3, %c0_4] : memref<4x32x8xf32, #tpu.memory_space<vmem>>, vector<4x32x8xf32>
    "tpu.trace_start"() <{level = 10 : i32, message = "hmk,hkn->hmn"}> : () -> ()
    %cst = arith.constant dense<0.000000e+00> : vector<4x8x8xf32>
    %2 = tpu.matmul %0, %1, %cst {dimension_numbers = #tpu.dot_dimension_numbers<[2], [1], [1], [2], [0, 0, 0, 1, 1, 2], [0], [0]>, precision = #tpu.contract_precision<fp32>} : vector<4x8x32xf32>, vector<4x32x8xf32>, vector<4x8x8xf32> -> vector<4x8x8xf32>
    "tpu.trace_stop"() : () -> ()
    %c0_5 = arith.constant 0 : index
    %c0_6 = arith.constant 0 : index
    %c0_7 = arith.constant 0 : index
    %3 = vector.load %arg6[%c0_5, %c0_6, %c0_7] : memref<4x8x8xf32, #tpu.memory_space<vmem>>, vector<4x8x8xf32>
    tpu.vector_store %arg6[%c0_5, %c0_6, %c0_7], %2 {strides = array<i32>} : memref<4x8x8xf32, #tpu.memory_space<vmem>>, vector<4x8x8xf32>,
    return
  }
  func.func @transform_0(%arg0: i32, %arg1: i32, %arg2: i32, %arg3: i32) -> (i32, i32, i32) {
    %c0_i32 = arith.constant 0 : i32
    return %arg0, %arg1, %arg3 : i32, i32, i32
  }
  func.func @transform_1(%arg0: i32, %arg1: i32, %arg2: i32, %arg3: i32) -> (i32, i32, i32) {
    %c0_i32 = arith.constant 0 : i32
    return %arg0, %arg3, %arg2 : i32, i32, i32
  }
  func.func @transform_2(%arg0: i32, %arg1: i32, %arg2: i32, %arg3: i32) -> (i32, i32, i32) {
    %c0_i32 = arith.constant 0 : i32
    return %arg0, %arg1, %arg2 : i32, i32, i32
  }
}

</mosaic_0001>

<llo_original>
// kernel: quant_matmul.1
$region0: #{quant_matmul.1}
  #allocation0 [shape = 'u32[]', space=smem, size = 0x4, offset = 0x4, fixed_abs, tag = 'smem constant byte address 0x4 - core index']
  #allocation1 [shape = 'u32[72,128]{1,0:T(1,128)}', space=vmem, size = 0x9000, scoped, tag = 'internal scratch']
  %s0 = inlined_call_operand.vmem [shape: f32[8,8,32], index: 0, kind: input, shape index: {}]
  %s1 = inlined_call_operand.vmem [shape: f32[8,32,8], index: 1, kind: input, shape index: {}]
  %s2 = inlined_call_operand.hbm [shape: f32[8,8,8], index: 2, kind: output, shape index: {}]
  %s3 = sld [smem:[#allocation0]]
  $region41: #{quant_matmul.1} parent=0
    _
  %s5 = ssub.s32 1, %s3
  %s6 = scalar_select 0, %s5, %s3
  $region1: #{quant_matmul.1} parent=0
    #allocation2 [shape = 'u8[32768]{0}', space=vmem, size = 0x8000, scoped, tag = 'output window, operand 0']
    #allocation3 [shape = 's32[2]{0}', space=sflag, size = 0x8, scoped, tag = 'scoped memory for quant_matmul.1']
    %7 = vsyncpa [#allocation3], 0
    %s8 = scalar_lea.sflag [#allocation3], 1
    %9 = vsyncpa %s8, 0
    loop: start=0, step=1, limit=4
    $region2: #{quant_matmul.1} parent=1 // loop_pre_header
      _
    $region3: #{quant_matmul.1} parent=1 // loop_header
      %s11 = sphi 0, %s15
      %p12 = scmp.ge.s32.totalorder %s11, 4
      %s18 = sphi 0, %s44
      %s19 = sphi 0, %s40
      %s20 = sphi 0, %s36
      %s21 = sphi 0, %s32
      %s22 = sphi 0, %s18
      %s23 = sphi 0, %s19
      %s24 = sphi 0, %s20
      %s25 = sphi 0, %s21
      %s26 = sphi 0, %s22
      %s27 = sphi 0, %s23
      %s28 = sphi 0, %s24
      %s29 = sphi 0, %s25
      %s51 = sphi 0, %s53
      %s54 = sphi 0, %s51
      %s55 = sphi 0, %s54
      %s71 = sphi 0, %s55
      %s81 = sphi 0, %s83
      %s84 = sphi 0, %s81
      %s85 = sphi 0, %s84
      %s101 = sphi 0, %s85
      %s111 = sphi 0, %s113
      %s114 = sphi 0, %s111
      %s115 = sphi 0, %s114
      %s131 = sphi 0, %s115
    $region4: #{quant_matmul.1} parent=1 // loop_header_branch
      %14 = sbr.rel (%p12) target = $region8
    $region5: #{quant_matmul.1} parent=1 // loop_body
      %s16 = ssub.s32 %s11, 1
      %s17 = ssub.s32 %s11, 2
      %s30 = sadd.s32 1, %s21
      %p31 = scmp.ge.s32.totalorder %s30, 1
      %s32 = scalar_select %p31, 0, %s30
      %s33 = sadd.s32 1, %s20
      %s34 = scalar_select %p31, %s33, %s20
      %p35 = scmp.ge.s32.totalorder %s34, 1
      %s36 = scalar_select %p35, 0, %s34
      %s37 = sadd.s32 1, %s19
      %s38 = scalar_select %p35, %s37, %s19
      %p39 = scmp.ge.s32.totalorder %s38, 1
      %s40 = scalar_select %p39, 0, %s38
      %s41 = sadd.s32 1, %s18
      %s42 = scalar_select %p39, %s41, %s18
      %p43 = scmp.ge.s32.totalorder %s42, 2
      %s44 = scalar_select %p43, 0, %s42
      %s45 = ssub.s32 %s18, %s44
      %s46 = ssub.s32 %s19, %s40
      %s47 = sor.u32 %s45, %s46
      %s48 = ssub.s32 %s21, %s32
      %s49 = sor.u32 %s47, %s48
      %p50 = scmp.eq.s32.totalorder %s49, 0
      %s52 = sadd.s32 %s51, 1
      %s53 = scalar_select %p50, %s51, %s52
      %p56 = pneg %p50
      %p57 = scmp.eq.s32.totalorder %s11, 1
      %p58 = por %p56, %p57
      %p59 = scmp.ne.s32.totalorder %s51, %s54
      %p60 = scmp.eq.s32.totalorder %s11, 0
      %p61 = por %p59, %p60
      %p62 = scmp.ne.s32.totalorder %s51, %s54
      %p63 = scmp.eq.s32.totalorder %s16, 1
      %p64 = por %p62, %p63
      %p65 = scmp.ne.s32.totalorder %s54, %s55
      %p66 = scmp.eq.s32.totalorder %s16, 0
      %p67 = por %p65, %p66
      %p68 = scmp.ne.s32.totalorder %s54, %s55
      %p69 = scmp.eq.s32.totalorder %s17, 1
      %p70 = por %p68, %p69
      %p72 = scmp.ne.s32.totalorder %s55, %s71
      %p73 = scmp.eq.s32.totalorder %s17, 0
      %p74 = por %p72, %p73
      %s75 = ssub.s32 %s18, %s44
      %s76 = ssub.s32 %s21, %s32
      %s77 = sor.u32 %s75, %s76
      %s78 = ssub.s32 %s20, %s36
      %s79 = sor.u32 %s77, %s78
      %p80 = scmp.eq.s32.totalorder %s79, 0
      %s82 = sadd.s32 %s81, 1
      %s83 = scalar_select %p80, %s81, %s82
      %p86 = pneg %p80
      %p87 = scmp.eq.s32.totalorder %s11, 1
      %p88 = por %p86, %p87
      %p89 = scmp.ne.s32.totalorder %s81, %s84
      %p90 = scmp.eq.s32.totalorder %s11, 0
      %p91 = por %p89, %p90
      %p92 = scmp.ne.s32.totalorder %s81, %s84
      %p93 = scmp.eq.s32.totalorder %s16, 1
      %p94 = por %p92, %p93
      %p95 = scmp.ne.s32.totalorder %s84, %s85
      %p96 = scmp.eq.s32.totalorder %s16, 0
      %p97 = por %p95, %p96
      %p98 = scmp.ne.s32.totalorder %s84, %s85
      %p99 = scmp.eq.s32.totalorder %s17, 1
      %p100 = por %p98, %p99
      %p102 = scmp.ne.s32.totalorder %s85, %s101
      %p103 = scmp.eq.s32.totalorder %s17, 0
      %p104 = por %p102, %p103
      %s105 = ssub.s32 %s18, %s44
      %s106 = ssub.s32 %s19, %s40
      %s107 = sor.u32 %s105, %s106
      %s108 = ssub.s32 %s20, %s36
      %s109 = sor.u32 %s107, %s108
      %p110 = scmp.eq.s32.totalorder %s109, 0
      %s112 = sadd.s32 %s111, 1
      %s113 = scalar_select %p110, %s111, %s112
      %p116 = pneg %p110
      %p117 = scmp.eq.s32.totalorder %s11, 1
      %p118 = por %p116, %p117
      %p119 = scmp.ne.s32.totalorder %s111, %s114
      %p120 = scmp.eq.s32.totalorder %s11, 0
      %p121 = por %p119, %p120
      %p122 = scmp.ne.s32.totalorder %s111, %s114
      %p123 = scmp.eq.s32.totalorder %s16, 1
      %p124 = por %p122, %p123
      %p125 = scmp.ne.s32.totalorder %s114, %s115
      %p126 = scmp.eq.s32.totalorder %s16, 0
      %p127 = por %p125, %p126
      %p128 = scmp.ne.s32.totalorder %s114, %s115
      %p129 = scmp.eq.s32.totalorder %s17, 1
      %p130 = por %p128, %p129
      %p132 = scmp.ne.s32.totalorder %s115, %s131
      %p133 = scmp.eq.s32.totalorder %s17, 0
      %p134 = por %p132, %p133
      %p135 = scmp.le.s32.totalorder 1, %s11
      %p136 = scmp.lt.s32.totalorder %s11, 3
      %p137 = pnand %p135, %p136
      %p138 = pneg %p137
      // Predicated region
      $region9: #{quant_matmul.1} parent=5 // pred_check
        _
      $region10: #{quant_matmul.1} parent=5 // pred_check_branch
        %140 = sbr.rel (%p137) target = $region12
      $region11: #{quant_matmul.1} parent=5 // pred_region
        %s141 = ssub.s32 %s11, 1
      $region12: #{quant_matmul.1} parent=5 // pred_fallthru
        _
      %p142 = scmp.lt.s32.totalorder %s11, 2
      // Predicated region
      $region13: #{quant_matmul.1} parent=5 // pred_check
        %p143 = pneg %p142
      $region14: #{quant_matmul.1} parent=5 // pred_check_branch
        %145 = sbr.rel (%p143) target = $region16
      $region15: #{quant_matmul.1} parent=5 // pred_region
        // Predicated region
        $region17: #{quant_matmul.1} parent=15 // pred_check
          %p146 = pneg %p61
        $region18: #{quant_matmul.1} parent=15 // pred_check_branch
          %148 = sbr.rel (%p146) target = $region20
        $region19: #{quant_matmul.1} parent=15 // pred_region
          %s149 = smul.u32 4, %s18
          %p150 = scmp.lt.s32.totalorder %s149, 7
          %s151 = scalar_select %p150, %s149, 7
          %p152 = scmp.lt.s32.totalorder %s19, 0
          %s153 = scalar_select %p152, %s19, 0
          %p154 = scmp.lt.s32.totalorder %s21, 0
          %s155 = scalar_select %p154, %s21, 0
          %s156 = sadd.s32 %s155, %s153
          %s157 = sadd.s32 %s156, %s151
          %s158 = smul.addr %s157, 8
          %s159 = scalar_lea.vmem %s0, %s158
          %s160 = smul.u32 4, %s18
        $region20: #{quant_matmul.1} parent=15 // pred_fallthru
          _
        // Predicated region
        $region21: #{quant_matmul.1} parent=15 // pred_check
          %p161 = pneg %p91
        $region22: #{quant_matmul.1} parent=15 // pred_check_branch
          %163 = sbr.rel (%p161) target = $region24
        $region23: #{quant_matmul.1} parent=15 // pred_region
          %s164 = smul.u32 4, %s18
          %s165 = smul.u32 4, %s21
          %p166 = scmp.lt.s32.totalorder %s164, 7
          %s167 = scalar_select %p166, %s164, 7
          %p168 = scmp.lt.s32.totalorder %s165, 3
          %s169 = scalar_select %p168, %s165, 3
          %p170 = scmp.lt.s32.totalorder %s20, 0
          %s171 = scalar_select %p170, %s20, 0
          %s172 = sadd.s32 %s171, %s169
          %s173 = smul.addr %s167, 4
          %s174 = sadd.s32 %s172, %s173
          %s175 = smul.addr %s174, 8
          %s176 = scalar_lea.vmem %s1, %s175
          %s177 = smul.u32 4, %s18
          %s178 = smul.u32 4, %s21
        $region24: #{quant_matmul.1} parent=15 // pred_fallthru
          _
      $region16: #{quant_matmul.1} parent=5 // pred_fallthru
        _
      %p179 = scmp.le.s32.totalorder 1, %s11
      %p180 = scmp.lt.s32.totalorder %s11, 3
      %p181 = pnand %p179, %p180
      %p182 = pneg %p181
      // Predicated region
      $region25: #{quant_matmul.1} parent=5 // pred_check
        _
      $region26: #{quant_matmul.1} parent=5 // pred_check_branch
        %184 = sbr.rel (%p181) target = $region28
      $region27: #{quant_matmul.1} parent=5 // pred_region
        %s185 = ssub.s32 %s11, 1
        %s186 = smul.u32 4, %s22
        %p187 = scmp.lt.s32.totalorder %s186, 7
        %s188 = scalar_select %p187, %s186, 7
        %p189 = scmp.lt.s32.totalorder %s23, 0
        %s190 = scalar_select %p189, %s23, 0
        %p191 = scmp.lt.s32.totalorder %s25, 0
        %s192 = scalar_select %p191, %s25, 0
        %s193 = sadd.s32 %s192, %s190
        %s194 = sadd.s32 %s193, %s188
        %s195 = smul.addr %s194, 8
        %s196 = scalar_lea.vmem %s0, %s195
        %p197 = pneg %p67
        %p198 = pneg %p64
        %s199 = smul.u32 4, %s22
        %s200 = smul.u32 4, %s25
        %p201 = scmp.lt.s32.totalorder %s199, 7
        %s202 = scalar_select %p201, %s199, 7
        %p203 = scmp.lt.s32.totalorder %s200, 3
        %s204 = scalar_select %p203, %s200, 3
        %p205 = scmp.lt.s32.totalorder %s24, 0
        %s206 = scalar_select %p205, %s24, 0
        %s207 = sadd.s32 %s206, %s204
        %s208 = smul.addr %s202, 4
        %s209 = sadd.s32 %s207, %s208
        %s210 = smul.addr %s209, 8
        %s211 = scalar_lea.vmem %s1, %s210
        %p212 = pneg %p97
        %p213 = pneg %p94
        %p214 = pneg %p127
        %p215 = pneg %p124
        %s216 = sand.u32 %s114, 1
        %s217 = scalar_lea.sflag [#allocation3], %s216
        %s218 = sand.u32 %s114, 1
        %s219 = smul.addr %s218, 32
        %s220 = scalar_lea.vmem [#allocation2], %s219
        %s221 = smul.u32 4, %s22
        %p222 = scmp.lt.s32.totalorder %s221, 7
        %s223 = scalar_select %p222, %s221, 7
        %p224 = scmp.lt.s32.totalorder %s23, 0
        %s225 = scalar_select %p224, %s23, 0
        %p226 = scmp.lt.s32.totalorder %s25, 0
        %s227 = scalar_select %p226, %s25, 0
        %s228 = sadd.s32 %s227, %s225
        %s229 = sadd.s32 %s228, %s223
        %s230 = smul.addr %s229, 8
        %s231 = scalar_lea.vmem %s0, %s230
        %s232 = smul.u32 4, %s22
        %s233 = smul.u32 4, %s22
        %s234 = smul.u32 4, %s25
        %p235 = scmp.lt.s32.totalorder %s233, 7
        %s236 = scalar_select %p235, %s233, 7
        %p237 = scmp.lt.s32.totalorder %s234, 3
        %s238 = scalar_select %p237, %s234, 3
        %p239 = scmp.lt.s32.totalorder %s24, 0
        %s240 = scalar_select %p239, %s24, 0
        %s241 = sadd.s32 %s240, %s238
        %s242 = smul.addr %s236, 4
        %s243 = sadd.s32 %s241, %s242
        %s244 = smul.addr %s243, 8
        %s245 = scalar_lea.vmem %s1, %s244
        %s246 = smul.u32 4, %s22
        %s247 = smul.u32 4, %s25
        %s248 = smul.u32 4, %s22
        %v249 = vld [vmem:[%s231] sm:$0xff]
        %v250 = vld [vmem:[%s231 + $0x8] sm:$0xff]
        %v251 = vld [vmem:[%s231 + $0x10] sm:$0xff]
        %v252 = vld [vmem:[%s231 + $0x18] sm:$0xff]
        %v253 = vld [vmem:[%s245] sm:$0xff]
        %v254 = vld [vmem:[%s245 + $0x8] sm:$0xff]
        %v255 = vld [vmem:[%s245 + $0x10] sm:$0xff]
        %v256 = vld [vmem:[%s245 + $0x18] sm:$0xff]
        %v257 = vld [vmem:[%s245 + $0x20] sm:$0xff]
        %v258 = vld [vmem:[%s245 + $0x28] sm:$0xff]
        %v259 = vld [vmem:[%s245 + $0x30] sm:$0xff]
        %v260 = vld [vmem:[%s245 + $0x38] sm:$0xff]
        %v261 = vld [vmem:[%s245 + $0x40] sm:$0xff]
        %v262 = vld [vmem:[%s245 + $0x48] sm:$0xff]
        %v263 = vld [vmem:[%s245 + $0x50] sm:$0xff]
        %v264 = vld [vmem:[%s245 + $0x58] sm:$0xff]
        %v265 = vld [vmem:[%s245 + $0x60] sm:$0xff]
        %v266 = vld [vmem:[%s245 + $0x68] sm:$0xff]
        %v267 = vld [vmem:[%s245 + $0x70] sm:$0xff]
        %v268 = vld [vmem:[%s245 + $0x78] sm:$0xff]
        %vm269 = vcmask 261120
        %v271 = vsel %vm269, %v249, 0
        %273 = vmatpush.msra.mxu0 0.0
        %274 = vmatpush.msra.mxu0 0.0
        %275 = vmatpush.msra.mxu0 0.0
        %276 = vmatpush.msra.mxu0 0.0
        %277 = vmatpush.msra.mxu0 0.0
        %278 = vmatpush.msra.mxu0 0.0
        %279 = vmatpush.msra.mxu0 0.0
        %280 = vmatpush.msra.mxu0 0.0
        %281 = vmatpush.msra.mxu0 0.0
        %282 = vmatpush.msra.mxu0 0.0
        %283 = vmatpush.msra.mxu0 0.0
        %284 = vmatpush.msra.mxu0 0.0
        %v285 = vand.u32 %v256, 4294901760
        %286 = vmatpush.msra.mxu0 %v285
        %v287 = vand.u32 %v255, 4294901760
        %288 = vmatpush.msra.mxu0 %v287
        %v289 = vand.u32 %v254, 4294901760
        %290 = vmatpush.msra.mxu0 %v289
        %v291 = vand.u32 %v253, 4294901760
        %292 = vmatpush.msra.mxu0 %v291
        %v293 = vand.u32 %v271, 4294901760
        %v294 = vsub.f32 %v271, %v293
        %v295 = vand.u32 %v294, 4294901760
        %v296 = vsub.f32 %v294, %v295
        %v297 = vand.u32 %v296, 4294901760
        %298 = vmatmul.f32.gmra.mxu0 %v297
        %v299 = vpop.f32.mrf.mxu0
        %v300 = vadd.f32 0.0, %v299
        %301 = vdwg.mxu0
        %302 = vmatpush.msra.mxu0 0.0
        %303 = vmatpush.msra.mxu0 0.0
        %304 = vmatpush.msra.mxu0 0.0
        %305 = vmatpush.msra.mxu0 0.0
        %306 = vmatpush.msra.mxu0 0.0
        %307 = vmatpush.msra.mxu0 0.0
        %308 = vmatpush.msra.mxu0 0.0
        %309 = vmatpush.msra.mxu0 0.0
        %310 = vmatpush.msra.mxu0 0.0
        %311 = vmatpush.msra.mxu0 0.0
        %312 = vmatpush.msra.mxu0 0.0
        %313 = vmatpush.msra.mxu0 0.0
        %v314 = vand.u32 %v256, 4294901760
        %v315 = vsub.f32 %v256, %v314
        %v316 = vand.u32 %v315, 4294901760
        %v317 = vsub.f32 %v315, %v316
        %v318 = vand.u32 %v317, 4294901760
        %319 = vmatpush.msra.mxu0 %v318
        %v320 = vand.u32 %v255, 4294901760
        %v321 = vsub.f32 %v255, %v320
        %v322 = vand.u32 %v321, 4294901760
        %v323 = vsub.f32 %v321, %v322
        %v324 = vand.u32 %v323, 4294901760
        %325 = vmatpush.msra.mxu0 %v324
        %v326 = vand.u32 %v254, 4294901760
        %v327 = vsub.f32 %v254, %v326
        %v328 = vand.u32 %v327, 4294901760
        %v329 = vsub.f32 %v327, %v328
        %v330 = vand.u32 %v329, 4294901760
        %331 = vmatpush.msra.mxu0 %v330
        %v332 = vand.u32 %v253, 4294901760
        %v333 = vsub.f32 %v253, %v332
        %v334 = vand.u32 %v333, 4294901760
        %v335 = vsub.f32 %v333, %v334
        %v336 = vand.u32 %v335, 4294901760
        %337 = vmatpush.msra.mxu0 %v336
        %v338 = vand.u32 %v271, 4294901760
        %339 = vmatmul.f32.gmra.mxu0 %v338
        %v340 = vpop.f32.mrf.mxu0
        %v341 = vadd.f32 %v300, %v340
        %342 = vdwg.mxu0
        %343 = vmatpush.msra.mxu0 0.0
        %344 = vmatpush.msra.mxu0 0.0
        %345 = vmatpush.msra.mxu0 0.0
        %346 = vmatpush.msra.mxu0 0.0
        %347 = vmatpush.msra.mxu0 0.0
        %348 = vmatpush.msra.mxu0 0.0
        %349 = vmatpush.msra.mxu0 0.0
        %350 = vmatpush.msra.mxu0 0.0
        %351 = vmatpush.msra.mxu0 0.0
        %352 = vmatpush.msra.mxu0 0.0
        %353 = vmatpush.msra.mxu0 0.0
        %354 = vmatpush.msra.mxu0 0.0
        %v355 = vand.u32 %v256, 4294901760
        %v356 = vsub.f32 %v256, %v355
        %357 = vmatpush.msra.mxu0 %v356
        %v358 = vand.u32 %v255, 4294901760
        %v359 = vsub.f32 %v255, %v358
        %360 = vmatpush.msra.mxu0 %v359
        %v361 = vand.u32 %v254, 4294901760
        %v362 = vsub.f32 %v254, %v361
        %363 = vmatpush.msra.mxu0 %v362
        %v364 = vand.u32 %v253, 4294901760
        %v365 = vsub.f32 %v253, %v364
        %366 = vmatpush.msra.mxu0 %v365
        %v367 = vand.u32 %v271, 4294901760
        %v368 = vsub.f32 %v271, %v367
        %369 = vmatmul.f32.gmra.mxu0 %v368
        %v370 = vpop.f32.mrf.mxu0
        %v371 = vadd.f32 %v341, %v370
        %372 = vdwg.mxu0
        %373 = vmatpush.msra.mxu0 0.0
        %374 = vmatpush.msra.mxu0 0.0
        %375 = vmatpush.msra.mxu0 0.0
        %376 = vmatpush.msra.mxu0 0.0
        %377 = vmatpush.msra.mxu0 0.0
        %378 = vmatpush.msra.mxu0 0.0
        %379 = vmatpush.msra.mxu0 0.0
        %380 = vmatpush.msra.mxu0 0.0
        %381 = vmatpush.msra.mxu0 0.0
        %382 = vmatpush.msra.mxu0 0.0
        %383 = vmatpush.msra.mxu0 0.0
        %384 = vmatpush.msra.mxu0 0.0
        %v385 = vand.u32 %v256, 4294901760
        %386 = vmatpush.msra.mxu0 %v385
        %v387 = vand.u32 %v255, 4294901760
        %388 = vmatpush.msra.mxu0 %v387
        %v389 = vand.u32 %v254, 4294901760
        %390 = vmatpush.msra.mxu0 %v389
        %v391 = vand.u32 %v253, 4294901760
        %392 = vmatpush.msra.mxu0 %v391
        %v393 = vand.u32 %v271, 4294901760
        %v394 = vsub.f32 %v271, %v393
        %v395 = vand.u32 %v394, 4294901760
        %396 = vmatmul.f32.gmra.mxu0 %v395
        %v397 = vpop.f32.mrf.mxu0
        %v398 = vadd.f32 %v371, %v397
        %399 = vdwg.mxu0
        %400 = vmatpush.msra.mxu0 0.0
        %401 = vmatpush.msra.mxu0 0.0
        %402 = vmatpush.msra.mxu0 0.0
        %403 = vmatpush.msra.mxu0 0.0
        %404 = vmatpush.msra.mxu0 0.0
        %405 = vmatpush.msra.mxu0 0.0
        %406 = vmatpush.msra.mxu0 0.0
        %407 = vmatpush.msra.mxu0 0.0
        %408 = vmatpush.msra.mxu0 0.0
        %409 = vmatpush.msra.mxu0 0.0
        %410 = vmatpush.msra.mxu0 0.0
        %411 = vmatpush.msra.mxu0 0.0
        %v412 = vand.u32 %v256, 4294901760
        %v413 = vsub.f32 %v256, %v412
        %v414 = vand.u32 %v413, 4294901760
        %415 = vmatpush.msra.mxu0 %v414
        %v416 = vand.u32 %v255, 4294901760
        %v417 = vsub.f32 %v255, %v416
        %v418 = vand.u32 %v417, 4294901760
        %419 = vmatpush.msra.mxu0 %v418
        %v420 = vand.u32 %v254, 4294901760
        %v421 = vsub.f32 %v254, %v420
        %v422 = vand.u32 %v421, 4294901760
        %423 = vmatpush.msra.mxu0 %v422
        %v424 = vand.u32 %v253, 4294901760
        %v425 = vsub.f32 %v253, %v424
        %v426 = vand.u32 %v425, 4294901760
        %427 = vmatpush.msra.mxu0 %v426
        %v428 = vand.u32 %v271, 4294901760
        %429 = vmatmul.f32.gmra.mxu0 %v428
        %v430 = vpop.f32.mrf.mxu0
        %v431 = vadd.f32 %v398, %v430
        %432 = vdwg.mxu0
        %433 = vmatpush.msra.mxu0 0.0
        %434 = vmatpush.msra.mxu0 0.0
        %435 = vmatpush.msra.mxu0 0.0
        %436 = vmatpush.msra.mxu0 0.0
        %437 = vmatpush.msra.mxu0 0.0
        %438 = vmatpush.msra.mxu0 0.0
        %439 = vmatpush.msra.mxu0 0.0
        %440 = vmatpush.msra.mxu0 0.0
        %441 = vmatpush.msra.mxu0 0.0
        %442 = vmatpush.msra.mxu0 0.0
        %443 = vmatpush.msra.mxu0 0.0
        %444 = vmatpush.msra.mxu0 0.0
        %v445 = vand.u32 %v256, 4294901760
        %446 = vmatpush.msra.mxu0 %v445
        %v447 = vand.u32 %v255, 4294901760
        %448 = vmatpush.msra.mxu0 %v447
        %v449 = vand.u32 %v254, 4294901760
        %450 = vmatpush.msra.mxu0 %v449
        %v451 = vand.u32 %v253, 4294901760
        %452 = vmatpush.msra.mxu0 %v451
        %v453 = vand.u32 %v271, 4294901760
        %454 = vmatmul.f32.gmra.mxu0 %v453
        %v455 = vpop.f32.mrf.mxu0
        %v456 = vadd.f32 %v431, %v455
        %457 = vdwg.mxu0
        %v459 = vsel %vm269, %v250, 0
        %461 = vmatpush.msra.mxu0 0.0
        %462 = vmatpush.msra.mxu0 0.0
        %463 = vmatpush.msra.mxu0 0.0
        %464 = vmatpush.msra.mxu0 0.0
        %465 = vmatpush.msra.mxu0 0.0
        %466 = vmatpush.msra.mxu0 0.0
        %467 = vmatpush.msra.mxu0 0.0
        %468 = vmatpush.msra.mxu0 0.0
        %469 = vmatpush.msra.mxu0 0.0
        %470 = vmatpush.msra.mxu0 0.0
        %471 = vmatpush.msra.mxu0 0.0
        %472 = vmatpush.msra.mxu0 0.0
        %v473 = vand.u32 %v260, 4294901760
        %474 = vmatpush.msra.mxu0 %v473
        %v475 = vand.u32 %v259, 4294901760
        %476 = vmatpush.msra.mxu0 %v475
        %v477 = vand.u32 %v258, 4294901760
        %478 = vmatpush.msra.mxu0 %v477
        %v479 = vand.u32 %v257, 4294901760
        %480 = vmatpush.msra.mxu0 %v479
        %v481 = vand.u32 %v459, 4294901760
        %v482 = vsub.f32 %v459, %v481
        %v483 = vand.u32 %v482, 4294901760
        %v484 = vsub.f32 %v482, %v483
        %v485 = vand.u32 %v484, 4294901760
        %486 = vmatmul.f32.gmra.mxu0 %v485
        %v487 = vpop.f32.mrf.mxu0
        %v488 = vadd.f32 0.0, %v487
        %489 = vdwg.mxu0
        %490 = vmatpush.msra.mxu0 0.0
        %491 = vmatpush.msra.mxu0 0.0
        %492 = vmatpush.msra.mxu0 0.0
        %493 = vmatpush.msra.mxu0 0.0
        %494 = vmatpush.msra.mxu0 0.0
        %495 = vmatpush.msra.mxu0 0.0
        %496 = vmatpush.msra.mxu0 0.0
        %497 = vmatpush.msra.mxu0 0.0
        %498 = vmatpush.msra.mxu0 0.0
        %499 = vmatpush.msra.mxu0 0.0
        %500 = vmatpush.msra.mxu0 0.0
        %501 = vmatpush.msra.mxu0 0.0
        %v502 = vand.u32 %v260, 4294901760
        %v503 = vsub.f32 %v260, %v502
        %v504 = vand.u32 %v503, 4294901760
        %v505 = vsub.f32 %v503, %v504
        %v506 = vand.u32 %v505, 4294901760
        %507 = vmatpush.msra.mxu0 %v506
        %v508 = vand.u32 %v259, 4294901760
        %v509 = vsub.f32 %v259, %v508
        %v510 = vand.u32 %v509, 4294901760
        %v511 = vsub.f32 %v509, %v510
        %v512 = vand.u32 %v511, 4294901760
        %513 = vmatpush.msra.mxu0 %v512
        %v514 = vand.u32 %v258, 4294901760
        %v515 = vsub.f32 %v258, %v514
        %v516 = vand.u32 %v515, 4294901760
        %v517 = vsub.f32 %v515, %v516
        %v518 = vand.u32 %v517, 4294901760
        %519 = vmatpush.msra.mxu0 %v518
        %v520 = vand.u32 %v257, 4294901760
        %v521 = vsub.f32 %v257, %v520
        %v522 = vand.u32 %v521, 4294901760
        %v523 = vsub.f32 %v521, %v522
        %v524 = vand.u32 %v523, 4294901760
        %525 = vmatpush.msra.mxu0 %v524
        %v526 = vand.u32 %v459, 4294901760
        %527 = vmatmul.f32.gmra.mxu0 %v526
        %v528 = vpop.f32.mrf.mxu0
        %v529 = vadd.f32 %v488, %v528
        %530 = vdwg.mxu0
        %531 = vmatpush.msra.mxu0 0.0
        %532 = vmatpush.msra.mxu0 0.0
        %533 = vmatpush.msra.mxu0 0.0
        %534 = vmatpush.msra.mxu0 0.0
        %535 = vmatpush.msra.mxu0 0.0
        %536 = vmatpush.msra.mxu0 0.0
        %537 = vmatpush.msra.mxu0 0.0
        %538 = vmatpush.msra.mxu0 0.0
        %539 = vmatpush.msra.mxu0 0.0
        %540 = vmatpush.msra.mxu0 0.0
        %541 = vmatpush.msra.mxu0 0.0
        %542 = vmatpush.msra.mxu0 0.0
        %v543 = vand.u32 %v260, 4294901760
        %v544 = vsub.f32 %v260, %v543
        %545 = vmatpush.msra.mxu0 %v544
        %v546 = vand.u32 %v259, 4294901760
        %v547 = vsub.f32 %v259, %v546
        %548 = vmatpush.msra.mxu0 %v547
        %v549 = vand.u32 %v258, 4294901760
        %v550 = vsub.f32 %v258, %v549
        %551 = vmatpush.msra.mxu0 %v550
        %v552 = vand.u32 %v257, 4294901760
        %v553 = vsub.f32 %v257, %v552
        %554 = vmatpush.msra.mxu0 %v553
        %v555 = vand.u32 %v459, 4294901760
        %v556 = vsub.f32 %v459, %v555
        %557 = vmatmul.f32.gmra.mxu0 %v556
        %v558 = vpop.f32.mrf.mxu0
        %v559 = vadd.f32 %v529, %v558
        %560 = vdwg.mxu0
        %561 = vmatpush.msra.mxu0 0.0
        %562 = vmatpush.msra.mxu0 0.0
        %563 = vmatpush.msra.mxu0 0.0
        %564 = vmatpush.msra.mxu0 0.0
        %565 = vmatpush.msra.mxu0 0.0
        %566 = vmatpush.msra.mxu0 0.0
        %567 = vmatpush.msra.mxu0 0.0
        %568 = vmatpush.msra.mxu0 0.0
        %569 = vmatpush.msra.mxu0 0.0
        %570 = vmatpush.msra.mxu0 0.0
        %571 = vmatpush.msra.mxu0 0.0
        %572 = vmatpush.msra.mxu0 0.0
        %v573 = vand.u32 %v260, 4294901760
        %574 = vmatpush.msra.mxu0 %v573
        %v575 = vand.u32 %v259, 4294901760
        %576 = vmatpush.msra.mxu0 %v575
        %v577 = vand.u32 %v258, 4294901760
        %578 = vmatpush.msra.mxu0 %v577
        %v579 = vand.u32 %v257, 4294901760
        %580 = vmatpush.msra.mxu0 %v579
        %v581 = vand.u32 %v459, 4294901760
        %v582 = vsub.f32 %v459, %v581
        %v583 = vand.u32 %v582, 4294901760
        %584 = vmatmul.f32.gmra.mxu0 %v583
        %v585 = vpop.f32.mrf.mxu0
        %v586 = vadd.f32 %v559, %v585
        %587 = vdwg.mxu0
        %588 = vmatpush.msra.mxu0 0.0
        %589 = vmatpush.msra.mxu0 0.0
        %590 = vmatpush.msra.mxu0 0.0
        %591 = vmatpush.msra.mxu0 0.0
        %592 = vmatpush.msra.mxu0 0.0
        %593 = vmatpush.msra.mxu0 0.0
        %594 = vmatpush.msra.mxu0 0.0
        %595 = vmatpush.msra.mxu0 0.0
        %596 = vmatpush.msra.mxu0 0.0
        %597 = vmatpush.msra.mxu0 0.0
        %598 = vmatpush.msra.mxu0 0.0
        %599 = vmatpush.msra.mxu0 0.0
        %v600 = vand.u32 %v260, 4294901760
        %v601 = vsub.f32 %v260, %v600
        %v602 = vand.u32 %v601, 4294901760
        %603 = vmatpush.msra.mxu0 %v602
        %v604 = vand.u32 %v259, 4294901760
        %v605 = vsub.f32 %v259, %v604
        %v606 = vand.u32 %v605, 4294901760
        %607 = vmatpush.msra.mxu0 %v606
        %v608 = vand.u32 %v258, 4294901760
        %v609 = vsub.f32 %v258, %v608
        %v610 = vand.u32 %v609, 4294901760
        %611 = vmatpush.msra.mxu0 %v610
        %v612 = vand.u32 %v257, 4294901760
        %v613 = vsub.f32 %v257, %v612
        %v614 = vand.u32 %v613, 4294901760
        %615 = vmatpush.msra.mxu0 %v614
        %v616 = vand.u32 %v459, 4294901760
        %617 = vmatmul.f32.gmra.mxu0 %v616
        %v618 = vpop.f32.mrf.mxu0
        %v619 = vadd.f32 %v586, %v618
        %620 = vdwg.mxu0
        %621 = vmatpush.msra.mxu0 0.0
        %622 = vmatpush.msra.mxu0 0.0
        %623 = vmatpush.msra.mxu0 0.0
        %624 = vmatpush.msra.mxu0 0.0
        %625 = vmatpush.msra.mxu0 0.0
        %626 = vmatpush.msra.mxu0 0.0
        %627 = vmatpush.msra.mxu0 0.0
        %628 = vmatpush.msra.mxu0 0.0
        %629 = vmatpush.msra.mxu0 0.0
        %630 = vmatpush.msra.mxu0 0.0
        %631 = vmatpush.msra.mxu0 0.0
        %632 = vmatpush.msra.mxu0 0.0
        %v633 = vand.u32 %v260, 4294901760
        %634 = vmatpush.msra.mxu0 %v633
        %v635 = vand.u32 %v259, 4294901760
        %636 = vmatpush.msra.mxu0 %v635
        %v637 = vand.u32 %v258, 4294901760
        %638 = vmatpush.msra.mxu0 %v637
        %v639 = vand.u32 %v257, 4294901760
        %640 = vmatpush.msra.mxu0 %v639
        %v641 = vand.u32 %v459, 4294901760
        %642 = vmatmul.f32.gmra.mxu0 %v641
        %v643 = vpop.f32.mrf.mxu0
        %v644 = vadd.f32 %v619, %v643
        %645 = vdwg.mxu0
        %v647 = vsel %vm269, %v251, 0
        %649 = vmatpush.msra.mxu0 0.0
        %650 = vmatpush.msra.mxu0 0.0
        %651 = vmatpush.msra.mxu0 0.0
        %652 = vmatpush.msra.mxu0 0.0
        %653 = vmatpush.msra.mxu0 0.0
        %654 = vmatpush.msra.mxu0 0.0
        %655 = vmatpush.msra.mxu0 0.0
        %656 = vmatpush.msra.mxu0 0.0
        %657 = vmatpush.msra.mxu0 0.0
        %658 = vmatpush.msra.mxu0 0.0
        %659 = vmatpush.msra.mxu0 0.0
        %660 = vmatpush.msra.mxu0 0.0
        %v661 = vand.u32 %v264, 4294901760
        %662 = vmatpush.msra.mxu0 %v661
        %v663 = vand.u32 %v263, 4294901760
        %664 = vmatpush.msra.mxu0 %v663
        %v665 = vand.u32 %v262, 4294901760
        %666 = vmatpush.msra.mxu0 %v665
        %v667 = vand.u32 %v261, 4294901760
        %668 = vmatpush.msra.mxu0 %v667
        %v669 = vand.u32 %v647, 4294901760
        %v670 = vsub.f32 %v647, %v669
        %v671 = vand.u32 %v670, 4294901760
        %v672 = vsub.f32 %v670, %v671
        %v673 = vand.u32 %v672, 4294901760
        %674 = vmatmul.f32.gmra.mxu0 %v673
        %v675 = vpop.f32.mrf.mxu0
        %v676 = vadd.f32 0.0, %v675
        %677 = vdwg.mxu0
        %678 = vmatpush.msra.mxu0 0.0
        %679 = vmatpush.msra.mxu0 0.0
        %680 = vmatpush.msra.mxu0 0.0
        %681 = vmatpush.msra.mxu0 0.0
        %682 = vmatpush.msra.mxu0 0.0
        %683 = vmatpush.msra.mxu0 0.0
        %684 = vmatpush.msra.mxu0 0.0
        %685 = vmatpush.msra.mxu0 0.0
        %686 = vmatpush.msra.mxu0 0.0
        %687 = vmatpush.msra.mxu0 0.0
        %688 = vmatpush.msra.mxu0 0.0
        %689 = vmatpush.msra.mxu0 0.0
        %v690 = vand.u32 %v264, 4294901760
        %v691 = vsub.f32 %v264, %v690
        %v692 = vand.u32 %v691, 4294901760
        %v693 = vsub.f32 %v691, %v692
        %v694 = vand.u32 %v693, 4294901760
        %695 = vmatpush.msra.mxu0 %v694
        %v696 = vand.u32 %v263, 4294901760
        %v697 = vsub.f32 %v263, %v696
        %v698 = vand.u32 %v697, 4294901760
        %v699 = vsub.f32 %v697, %v698
        %v700 = vand.u32 %v699, 4294901760
        %701 = vmatpush.msra.mxu0 %v700
        %v702 = vand.u32 %v262, 4294901760
        %v703 = vsub.f32 %v262, %v702
        %v704 = vand.u32 %v703, 4294901760
        %v705 = vsub.f32 %v703, %v704
        %v706 = vand.u32 %v705, 4294901760
        %707 = vmatpush.msra.mxu0 %v706
        %v708 = vand.u32 %v261, 4294901760
        %v709 = vsub.f32 %v261, %v708
        %v710 = vand.u32 %v709, 4294901760
        %v711 = vsub.f32 %v709, %v710
        %v712 = vand.u32 %v711, 4294901760
        %713 = vmatpush.msra.mxu0 %v712
        %v714 = vand.u32 %v647, 4294901760
        %715 = vmatmul.f32.gmra.mxu0 %v714
        %v716 = vpop.f32.mrf.mxu0
        %v717 = vadd.f32 %v676, %v716
        %718 = vdwg.mxu0
        %719 = vmatpush.msra.mxu0 0.0
        %720 = vmatpush.msra.mxu0 0.0
        %721 = vmatpush.msra.mxu0 0.0
        %722 = vmatpush.msra.mxu0 0.0
        %723 = vmatpush.msra.mxu0 0.0
        %724 = vmatpush.msra.mxu0 0.0
        %725 = vmatpush.msra.mxu0 0.0
        %726 = vmatpush.msra.mxu0 0.0
        %727 = vmatpush.msra.mxu0 0.0
        %728 = vmatpush.msra.mxu0 0.0
        %729 = vmatpush.msra.mxu0 0.0
        %730 = vmatpush.msra.mxu0 0.0
        %v731 = vand.u32 %v264, 4294901760
        %v732 = vsub.f32 %v264, %v731
        %733 = vmatpush.msra.mxu0 %v732
        %v734 = vand.u32 %v263, 4294901760
        %v735 = vsub.f32 %v263, %v734
        %736 = vmatpush.msra.mxu0 %v735
        %v737 = vand.u32 %v262, 4294901760
        %v738 = vsub.f32 %v262, %v737
        %739 = vmatpush.msra.mxu0 %v738
        %v740 = vand.u32 %v261, 4294901760
        %v741 = vsub.f32 %v261, %v740
        %742 = vmatpush.msra.mxu0 %v741
        %v743 = vand.u32 %v647, 4294901760
        %v744 = vsub.f32 %v647, %v743
        %745 = vmatmul.f32.gmra.mxu0 %v744
        %v746 = vpop.f32.mrf.mxu0
        %v747 = vadd.f32 %v717, %v746
        %748 = vdwg.mxu0
        %749 = vmatpush.msra.mxu0 0.0
        %750 = vmatpush.msra.mxu0 0.0
        %751 = vmatpush.msra.mxu0 0.0
        %752 = vmatpush.msra.mxu0 0.0
        %753 = vmatpush.msra.mxu0 0.0
        %754 = vmatpush.msra.mxu0 0.0
        %755 = vmatpush.msra.mxu0 0.0
        %756 = vmatpush.msra.mxu0 0.0
        %757 = vmatpush.msra.mxu0 0.0
        %758 = vmatpush.msra.mxu0 0.0
        %759 = vmatpush.msra.mxu0 0.0
        %760 = vmatpush.msra.mxu0 0.0
        %v761 = vand.u32 %v264, 4294901760
        %762 = vmatpush.msra.mxu0 %v761
        %v763 = vand.u32 %v263, 4294901760
        %764 = vmatpush.msra.mxu0 %v763
        %v765 = vand.u32 %v262, 4294901760
        %766 = vmatpush.msra.mxu0 %v765
        %v767 = vand.u32 %v261, 4294901760
        %768 = vmatpush.msra.mxu0 %v767
        %v769 = vand.u32 %v647, 4294901760
        %v770 = vsub.f32 %v647, %v769
        %v771 = vand.u32 %v770, 4294901760
        %772 = vmatmul.f32.gmra.mxu0 %v771
        %v773 = vpop.f32.mrf.mxu0
        %v774 = vadd.f32 %v747, %v773
        %775 = vdwg.mxu0
        %776 = vmatpush.msra.mxu0 0.0
        %777 = vmatpush.msra.mxu0 0.0
        %778 = vmatpush.msra.mxu0 0.0
        %779 = vmatpush.msra.mxu0 0.0
        %780 = vmatpush.msra.mxu0 0.0
        %781 = vmatpush.msra.mxu0 0.0
        %782 = vmatpush.msra.mxu0 0.0
        %783 = vmatpush.msra.mxu0 0.0
        %784 = vmatpush.msra.mxu0 0.0
        %785 = vmatpush.msra.mxu0 0.0
        %786 = vmatpush.msra.mxu0 0.0
        %787 = vmatpush.msra.mxu0 0.0
        %v788 = vand.u32 %v264, 4294901760
        %v789 = vsub.f32 %v264, %v788
        %v790 = vand.u32 %v789, 4294901760
        %791 = vmatpush.msra.mxu0 %v790
        %v792 = vand.u32 %v263, 4294901760
        %v793 = vsub.f32 %v263, %v792
        %v794 = vand.u32 %v793, 4294901760
        %795 = vmatpush.msra.mxu0 %v794
        %v796 = vand.u32 %v262, 4294901760
        %v797 = vsub.f32 %v262, %v796
        %v798 = vand.u32 %v797, 4294901760
        %799 = vmatpush.msra.mxu0 %v798
        %v800 = vand.u32 %v261, 4294901760
        %v801 = vsub.f32 %v261, %v800
        %v802 = vand.u32 %v801, 4294901760
        %803 = vmatpush.msra.mxu0 %v802
        %v804 = vand.u32 %v647, 4294901760
        %805 = vmatmul.f32.gmra.mxu0 %v804
        %v806 = vpop.f32.mrf.mxu0
        %v807 = vadd.f32 %v774, %v806
        %808 = vdwg.mxu0
        %809 = vmatpush.msra.mxu0 0.0
        %810 = vmatpush.msra.mxu0 0.0
        %811 = vmatpush.msra.mxu0 0.0
        %812 = vmatpush.msra.mxu0 0.0
        %813 = vmatpush.msra.mxu0 0.0
        %814 = vmatpush.msra.mxu0 0.0
        %815 = vmatpush.msra.mxu0 0.0
        %816 = vmatpush.msra.mxu0 0.0
        %817 = vmatpush.msra.mxu0 0.0
        %818 = vmatpush.msra.mxu0 0.0
        %819 = vmatpush.msra.mxu0 0.0
        %820 = vmatpush.msra.mxu0 0.0
        %v821 = vand.u32 %v264, 4294901760
        %822 = vmatpush.msra.mxu0 %v821
        %v823 = vand.u32 %v263, 4294901760
        %824 = vmatpush.msra.mxu0 %v823
        %v825 = vand.u32 %v262, 4294901760
        %826 = vmatpush.msra.mxu0 %v825
        %v827 = vand.u32 %v261, 4294901760
        %828 = vmatpush.msra.mxu0 %v827
        %v829 = vand.u32 %v647, 4294901760
        %830 = vmatmul.f32.gmra.mxu0 %v829
        %v831 = vpop.f32.mrf.mxu0
        %v832 = vadd.f32 %v807, %v831
        %833 = vdwg.mxu0
        %v835 = vsel %vm269, %v252, 0
        %837 = vmatpush.msra.mxu0 0.0
        %838 = vmatpush.msra.mxu0 0.0
        %839 = vmatpush.msra.mxu0 0.0
        %840 = vmatpush.msra.mxu0 0.0
        %841 = vmatpush.msra.mxu0 0.0
        %842 = vmatpush.msra.mxu0 0.0
        %843 = vmatpush.msra.mxu0 0.0
        %844 = vmatpush.msra.mxu0 0.0
        %845 = vmatpush.msra.mxu0 0.0
        %846 = vmatpush.msra.mxu0 0.0
        %847 = vmatpush.msra.mxu0 0.0
        %848 = vmatpush.msra.mxu0 0.0
        %v849 = vand.u32 %v268, 4294901760
        %850 = vmatpush.msra.mxu0 %v849
        %v851 = vand.u32 %v267, 4294901760
        %852 = vmatpush.msra.mxu0 %v851
        %v853 = vand.u32 %v266, 4294901760
        %854 = vmatpush.msra.mxu0 %v853
        %v855 = vand.u32 %v265, 4294901760
        %856 = vmatpush.msra.mxu0 %v855
        %v857 = vand.u32 %v835, 4294901760
        %v858 = vsub.f32 %v835, %v857
        %v859 = vand.u32 %v858, 4294901760
        %v860 = vsub.f32 %v858, %v859
        %v861 = vand.u32 %v860, 4294901760
        %862 = vmatmul.f32.gmra.mxu0 %v861
        %v863 = vpop.f32.mrf.mxu0
        %v864 = vadd.f32 0.0, %v863
        %865 = vdwg.mxu0
        %866 = vmatpush.msra.mxu0 0.0
        %867 = vmatpush.msra.mxu0 0.0
        %868 = vmatpush.msra.mxu0 0.0
        %869 = vmatpush.msra.mxu0 0.0
        %870 = vmatpush.msra.mxu0 0.0
        %871 = vmatpush.msra.mxu0 0.0
        %872 = vmatpush.msra.mxu0 0.0
        %873 = vmatpush.msra.mxu0 0.0
        %874 = vmatpush.msra.mxu0 0.0
        %875 = vmatpush.msra.mxu0 0.0
        %876 = vmatpush.msra.mxu0 0.0
        %877 = vmatpush.msra.mxu0 0.0
        %v878 = vand.u32 %v268, 4294901760
        %v879 = vsub.f32 %v268, %v878
        %v880 = vand.u32 %v879, 4294901760
        %v881 = vsub.f32 %v879, %v880
        %v882 = vand.u32 %v881, 4294901760
        %883 = vmatpush.msra.mxu0 %v882
        %v884 = vand.u32 %v267, 4294901760
        %v885 = vsub.f32 %v267, %v884
        %v886 = vand.u32 %v885, 4294901760
        %v887 = vsub.f32 %v885, %v886
        %v888 = vand.u32 %v887, 4294901760
        %889 = vmatpush.msra.mxu0 %v888
        %v890 = vand.u32 %v266, 4294901760
        %v891 = vsub.f32 %v266, %v890
        %v892 = vand.u32 %v891, 4294901760
        %v893 = vsub.f32 %v891, %v892
        %v894 = vand.u32 %v893, 4294901760
        %895 = vmatpush.msra.mxu0 %v894
        %v896 = vand.u32 %v265, 4294901760
        %v897 = vsub.f32 %v265, %v896
        %v898 = vand.u32 %v897, 4294901760
        %v899 = vsub.f32 %v897, %v898
        %v900 = vand.u32 %v899, 4294901760
        %901 = vmatpush.msra.mxu0 %v900
        %v902 = vand.u32 %v835, 4294901760
        %903 = vmatmul.f32.gmra.mxu0 %v902
        %v904 = vpop.f32.mrf.mxu0
        %v905 = vadd.f32 %v864, %v904
        %906 = vdwg.mxu0
        %907 = vmatpush.msra.mxu0 0.0
        %908 = vmatpush.msra.mxu0 0.0
        %909 = vmatpush.msra.mxu0 0.0
        %910 = vmatpush.msra.mxu0 0.0
        %911 = vmatpush.msra.mxu0 0.0
        %912 = vmatpush.msra.mxu0 0.0
        %913 = vmatpush.msra.mxu0 0.0
        %914 = vmatpush.msra.mxu0 0.0
        %915 = vmatpush.msra.mxu0 0.0
        %916 = vmatpush.msra.mxu0 0.0
        %917 = vmatpush.msra.mxu0 0.0
        %918 = vmatpush.msra.mxu0 0.0
        %v919 = vand.u32 %v268, 4294901760
        %v920 = vsub.f32 %v268, %v919
        %921 = vmatpush.msra.mxu0 %v920
        %v922 = vand.u32 %v267, 4294901760
        %v923 = vsub.f32 %v267, %v922
        %924 = vmatpush.msra.mxu0 %v923
        %v925 = vand.u32 %v266, 4294901760
        %v926 = vsub.f32 %v266, %v925
        %927 = vmatpush.msra.mxu0 %v926
        %v928 = vand.u32 %v265, 4294901760
        %v929 = vsub.f32 %v265, %v928
        %930 = vmatpush.msra.mxu0 %v929
        %v931 = vand.u32 %v835, 4294901760
        %v932 = vsub.f32 %v835, %v931
        %933 = vmatmul.f32.gmra.mxu0 %v932
        %v934 = vpop.f32.mrf.mxu0
        %v935 = vadd.f32 %v905, %v934
        %936 = vdwg.mxu0
        %937 = vmatpush.msra.mxu0 0.0
        %938 = vmatpush.msra.mxu0 0.0
        %939 = vmatpush.msra.mxu0 0.0
        %940 = vmatpush.msra.mxu0 0.0
        %941 = vmatpush.msra.mxu0 0.0
        %942 = vmatpush.msra.mxu0 0.0
        %943 = vmatpush.msra.mxu0 0.0
        %944 = vmatpush.msra.mxu0 0.0
        %945 = vmatpush.msra.mxu0 0.0
        %946 = vmatpush.msra.mxu0 0.0
        %947 = vmatpush.msra.mxu0 0.0
        %948 = vmatpush.msra.mxu0 0.0
        %v949 = vand.u32 %v268, 4294901760
        %950 = vmatpush.msra.mxu0 %v949
        %v951 = vand.u32 %v267, 4294901760
        %952 = vmatpush.msra.mxu0 %v951
        %v953 = vand.u32 %v266, 4294901760
        %954 = vmatpush.msra.mxu0 %v953
        %v955 = vand.u32 %v265, 4294901760
        %956 = vmatpush.msra.mxu0 %v955
        %v957 = vand.u32 %v835, 4294901760
        %v958 = vsub.f32 %v835, %v957
        %v959 = vand.u32 %v958, 4294901760
        %960 = vmatmul.f32.gmra.mxu0 %v959
        %v961 = vpop.f32.mrf.mxu0
        %v962 = vadd.f32 %v935, %v961
        %963 = vdwg.mxu0
        %964 = vmatpush.msra.mxu0 0.0
        %965 = vmatpush.msra.mxu0 0.0
        %966 = vmatpush.msra.mxu0 0.0
        %967 = vmatpush.msra.mxu0 0.0
        %968 = vmatpush.msra.mxu0 0.0
        %969 = vmatpush.msra.mxu0 0.0
        %970 = vmatpush.msra.mxu0 0.0
        %971 = vmatpush.msra.mxu0 0.0
        %972 = vmatpush.msra.mxu0 0.0
        %973 = vmatpush.msra.mxu0 0.0
        %974 = vmatpush.msra.mxu0 0.0
        %975 = vmatpush.msra.mxu0 0.0
        %v976 = vand.u32 %v268, 4294901760
        %v977 = vsub.f32 %v268, %v976
        %v978 = vand.u32 %v977, 4294901760
        %979 = vmatpush.msra.mxu0 %v978
        %v980 = vand.u32 %v267, 4294901760
        %v981 = vsub.f32 %v267, %v980
        %v982 = vand.u32 %v981, 4294901760
        %983 = vmatpush.msra.mxu0 %v982
        %v984 = vand.u32 %v266, 4294901760
        %v985 = vsub.f32 %v266, %v984
        %v986 = vand.u32 %v985, 4294901760
        %987 = vmatpush.msra.mxu0 %v986
        %v988 = vand.u32 %v265, 4294901760
        %v989 = vsub.f32 %v265, %v988
        %v990 = vand.u32 %v989, 4294901760
        %991 = vmatpush.msra.mxu0 %v990
        %v992 = vand.u32 %v835, 4294901760
        %993 = vmatmul.f32.gmra.mxu0 %v992
        %v994 = vpop.f32.mrf.mxu0
        %v995 = vadd.f32 %v962, %v994
        %996 = vdwg.mxu0
        %997 = vmatpush.msra.mxu0 0.0
        %998 = vmatpush.msra.mxu0 0.0
        %999 = vmatpush.msra.mxu0 0.0
        %1000 = vmatpush.msra.mxu0 0.0
        %1001 = vmatpush.msra.mxu0 0.0
        %1002 = vmatpush.msra.mxu0 0.0
        %1003 = vmatpush.msra.mxu0 0.0
        %1004 = vmatpush.msra.mxu0 0.0
        %1005 = vmatpush.msra.mxu0 0.0
        %1006 = vmatpush.msra.mxu0 0.0
        %1007 = vmatpush.msra.mxu0 0.0
        %1008 = vmatpush.msra.mxu0 0.0
        %v1009 = vand.u32 %v268, 4294901760
        %1010 = vmatpush.msra.mxu0 %v1009
        %v1011 = vand.u32 %v267, 4294901760
        %1012 = vmatpush.msra.mxu0 %v1011
        %v1013 = vand.u32 %v266, 4294901760
        %1014 = vmatpush.msra.mxu0 %v1013
        %v1015 = vand.u32 %v265, 4294901760
        %1016 = vmatpush.msra.mxu0 %v1015
        %v1017 = vand.u32 %v835, 4294901760
        %1018 = vmatmul.f32.gmra.mxu0 %v1017
        %v1019 = vpop.f32.mrf.mxu0
        %v1020 = vadd.f32 %v995, %v1019
        %1021 = vdwg.mxu0
        %vm1022 = vcmask 64512
        %1023 = vst.msk [vmem:[%s220] sm:$0xff] %vm1022, %v456
        %1024 = vst.msk [vmem:[%s220 + $0x8] sm:$0xff] %vm1022, %v644
        %1025 = vst.msk [vmem:[%s220 + $0x10] sm:$0xff] %vm1022, %v832
        %1026 = vst.msk [vmem:[%s220 + $0x18] sm:$0xff] %vm1022, %v1020
        %s1027 = sand.u32 %s114, 1
        %s1028 = scalar_lea.sflag [#allocation3], %s1027
        %s1029 = sand.u32 %s114, 1
        %s1030 = smul.addr %s1029, 32
        %s1031 = scalar_lea.vmem [#allocation2], %s1030
        // Predicated region
        $region29: #{quant_matmul.1} parent=27 // pred_check
          %p1032 = pneg %p124
        $region30: #{quant_matmul.1} parent=27 // pred_check_branch
          %1034 = sbr.rel (%p1032) target = $region32
        $region31: #{quant_matmul.1} parent=27 // pred_region
          %s1035 = smul.u32 4, %s22
          %1037 = vsyncadd %s1028, 0
          %s1038 = sadd.s32 %s24, %s23
          %s1039 = sadd.s32 %s1038, %s1035
          %s1040 = smul.addr %s1039, 8
          %s1041 = scalar_lea.hbm %s2, %s1040
          %s1042 = sshll.u32 %s1031, 4
          %s1043 = int_to_ptr.vmem [resolvable:$true] %s1042
          %s1044 = sshll.u32 %s1041, 4
          %s1045 = int_to_ptr.hbm [resolvable:$true] %s1044
          %1050 = dma.vmem_to_hbm [thread:$0]  %s1043, 512, %s1045, %s1028, 128, 128, 8
        $region32: #{quant_matmul.1} parent=27 // pred_fallthru
          _
      $region28: #{quant_matmul.1} parent=5 // pred_fallthru
        _
      %p1051 = scmp.le.s32.totalorder 2, %s11
      // Predicated region
      $region33: #{quant_matmul.1} parent=5 // pred_check
        %p1052 = pneg %p1051
      $region34: #{quant_matmul.1} parent=5 // pred_check_branch
        %1054 = sbr.rel (%p1052) target = $region36
      $region35: #{quant_matmul.1} parent=5 // pred_region
        %s1055 = ssub.s32 %s11, 2
        // Predicated region
        $region37: #{quant_matmul.1} parent=35 // pred_check
          %p1056 = pneg %p130
        $region38: #{quant_matmul.1} parent=35 // pred_check_branch
          %1058 = sbr.rel (%p1056) target = $region40
        $region39: #{quant_matmul.1} parent=35 // pred_region
          %s1059 = sand.u32 %s115, 1
          %s1060 = scalar_lea.sflag [#allocation3], %s1059
          %s1061 = sand.u32 %s115, 1
          %s1062 = smul.addr %s1061, 32
          %s1063 = scalar_lea.vmem [#allocation2], %s1062
          %1065 = dma.done %s1060, 512
        $region40: #{quant_matmul.1} parent=35 // pred_fallthru
          _
      $region36: #{quant_matmul.1} parent=5 // pred_fallthru
        _
    $region6: #{quant_matmul.1} parent=1 // loop_footer
      %s15 = sadd.s32 1, %s11
    $region7: #{quant_matmul.1} parent=1 // loop_footer_branch
      %10 = sbr.rel target = $region3
    $region8: #{quant_matmul.1} parent=1 // loop_exit
      _
    %1066 = vsyncpa [#allocation3], 1
    %s1067 = scalar_lea.sflag [#allocation3], 1
    %1068 = vsyncpa %s1067, 1

</llo_original>
